<compile_context>
chip_gen: v6e
topology: v6e:2x2x1
jax: 0.10.0
libtpu: 0.0.40
codegen_flags: <defaults>
</compile_context>

<pallas_src>
import functools

import jax
import jax.numpy as jnp
import numpy as np
from jax import lax
from jax.experimental import pallas as pl
from jax.experimental.pallas import tpu as pltpu

LANE = 128
SUBLANE = 8


def _cdiv(a, b):
    return -(-a // b)


def _round_up(a, b):
    return _cdiv(a, b) * b


def _num_tensorcores_per_chip():
    """2 on v7x (two TensorCores addressable via 'parallel' grid axes), else 1."""
    try:
        kind = jax.devices()[0].device_kind.lower()
    except Exception:
        return 1
    return 2 if ("v7" in kind or "7x" in kind) else 1


def _bce_focal_sum_kernel(x_ref, t_ref, out_ref, acc_ref, *, gamma, alpha, valid_rows):
    c = pl.program_id(0)                    # split axis ("parallel"; v7x 2 TCs)
    i = pl.program_id(1)                    # block axis within split ("arbitrary")
    bps = pl.num_programs(1)

    @pl.when(i == 0)
    def _():
        acc_ref[...] = jnp.zeros_like(acc_ref)

    x = x_ref[...].astype(jnp.float32)
    t = t_ref[...].astype(jnp.float32)

    # Numerically-stable sigmoid / log-sigmoid sharing one exp, one log:
    #   z = exp(-|x|)
    #   sigmoid(x)      = where(x>=0, 1/(1+z), z/(1+z))
    #   log(sigmoid(x)) = min(x,0) - log(1+z)
    #   log(1-sigmoid)  = log(sigmoid(x)) - x
    z = jnp.exp(-jnp.abs(x))
    denom = 1.0 + z
    r = pl.reciprocal(denom, approx=True)    # EUP slot (has slack)
    inv = r * (2.0 - denom * r)              # one Newton step -> ~full f32 accuracy
    zi = z * inv
    pos = x >= 0.0
    pt = jnp.where(pos, inv, zi)
    one_minus_pt = jnp.where(pos, zi, inv)
    # jnp.log(denom): log1p(z) would be marginally more accurate, but log(1+z)
    # keeps lowering simple and the error is negligible at rtol=1e-4.
    log1pz = jnp.log(denom)
    log_pt = jnp.minimum(x, 0.0) - log1pz
    log_1m_pt = log_pt - x

    g = float(gamma)                         # static dispatch; avoid pow on EUP
    if g == 2.0:
        w_pos = one_minus_pt * one_minus_pt
        w_neg = pt * pt
    elif g == 1.0:
        w_pos, w_neg = one_minus_pt, pt
    elif g == 0.0:
        w_pos = jnp.ones_like(pt)
        w_neg = w_pos
    else:
        w_pos = one_minus_pt ** g
        w_neg = pt ** g

    loss = ((-alpha) * w_pos * t * log_pt
            - (1.0 - alpha) * w_neg * (1.0 - t) * log_1m_pt)

    block_rows, lane = x_ref.shape
    bi = c * bps + i                         # global (unclamped) block index

    def _accum(v):
        # Tile-aligned reshape + leading-axis sum: pure VPU adds into one vreg.
        acc_ref[...] += v.reshape(-1, SUBLANE, lane).sum(axis=0)

    fully_valid = (bi + 1) * block_rows <= valid_rows

    @pl.when(fully_valid)
    def _():
        _accum(loss)

    @pl.when(jnp.logical_not(fully_valid))
    def _():
        # Only partial / redundant blocks pay for the iota mask.  where() is a
        # select, so garbage/NaN in the out-of-range rows never propagates.
        row = bi * block_rows + lax.broadcasted_iota(jnp.int32, (block_rows, lane), 0)
        _accum(jnp.where(row < valid_rows, loss, 0.0))

    @pl.when(i == bps - 1)
    def _():
        # Write the whole (8,128) accumulator (lane-dense); host does the final sum.
        out_ref[...] = acc_ref[...].reshape(out_ref.shape)


def _tail_loss_sum(x, t, gamma, alpha):
    """Plain-jnp loss sum for the <=127-element ragged tail (host graph)."""
    x = x.astype(jnp.float32)
    t = t.astype(jnp.float32)
    pt = jax.nn.sigmoid(x)
    log_pt = jax.nn.log_sigmoid(x)
    log_1m_pt = log_pt - x
    return jnp.sum(-alpha * (1.0 - pt) ** gamma * t * log_pt
                   - (1.0 - alpha) * pt ** gamma * (1.0 - t) * log_1m_pt)


def bce_focal_loss(_input, target, *, gamma=2, alpha=0.25,
                   reduction="elementwise_mean", max_block_rows=2048):
    """Pallas TPU implementation of BCEFocalLoss.forward."""
    assert _input.shape == target.shape
    n_elem = int(np.prod(_input.shape)) if _input.ndim > 0 else 1

    # Keep the caller's dtype (bf16 halves HBM traffic); cast to f32 in-kernel.
    x_flat = jnp.ravel(_input)
    t_flat = jnp.ravel(target)

    rows = n_elem // LANE
    n_main = rows * LANE

    loss_sum = jnp.float32(0.0)

    if n_elem > n_main:
        # Ragged tail (<128 elems): tiny plain-jnp sum, no full-array pad/copy.
        loss_sum = loss_sum + _tail_loss_sum(x_flat[n_main:], t_flat[n_main:],
                                             float(gamma), float(alpha))

    if rows > 0:
        x2 = x_flat[:n_main].reshape(rows, LANE)   # free when n_elem % 128 == 0
        t2 = t_flat[:n_main].reshape(rows, LANE)

        max_br = max(SUBLANE, _round_up(int(max_block_rows), SUBLANE))
        nb_target = _cdiv(rows, max_br)
        num_splits = _num_tensorcores_per_chip() if nb_target >= 2 else 1
        num_blocks = _round_up(nb_target, num_splits)       # balanced per split
        block_rows = min(_round_up(_cdiv(rows, num_blocks), SUBLANE), max_br)
        nb_real = _cdiv(rows, block_rows)                   # blocks touching real rows
        bps = num_blocks // num_splits

        def in_map(c, i):
            # Defensive clamp; any duplicate block is fully masked in-kernel.
            return (jnp.minimum(c * bps + i, nb_real - 1), 0)

        kernel = functools.partial(_bce_focal_sum_kernel,
                                   gamma=float(gamma), alpha=float(alpha),
                                   valid_rows=rows)

        partial = pl.pallas_call(
            kernel,
            out_shape=jax.ShapeDtypeStruct((num_splits, SUBLANE, LANE), jnp.float32),
            grid_spec=pltpu.PrefetchScalarGridSpec(
                num_scalar_prefetch=0,
                grid=(num_splits, bps),
                in_specs=[
                    pl.BlockSpec((block_rows, LANE), in_map),
                    pl.BlockSpec((block_rows, LANE), in_map),
                ],
                out_specs=pl.BlockSpec((1, SUBLANE, LANE), lambda c, i: (c, 0, 0)),
                scratch_shapes=[pltpu.VMEM((SUBLANE, LANE), jnp.float32)],
            ),
            compiler_params=pltpu.CompilerParams(
                dimension_semantics=("parallel", "arbitrary"),
                vmem_limit_bytes=32 * 1024 * 1024,
            ),
        )(x2, t2)

        loss_sum = loss_sum + jnp.sum(partial)

    if reduction == "elementwise_mean":
        return loss_sum / jnp.float32(n_elem)
    elif reduction == "sum":
        return loss_sum
    # TODO(synk): reduction='none' (unreduced elementwise loss) needs an
    # elementwise-output kernel; not wired through this sum-reducing kernel.
    raise NotImplementedError(f"Unsupported reduction: {reduction!r}")


def _reference(_input, target, gamma=2, alpha=0.25):
    x = _input.astype(jnp.float32)
    t = target.astype(jnp.float32)
    pt = jax.nn.sigmoid(x)
    loss = (-alpha * (1.0 - pt) ** gamma * t * jnp.log(pt)
            - (1.0 - alpha) * pt ** gamma * (1.0 - t) * jnp.log(1.0 - pt))
    return jnp.mean(loss)


if __name__ == "__main__":
    key = jax.random.PRNGKey(0)
    k1, k2, k3, k4, k5, k6 = jax.random.split(key, 6)

    # Case 1: small, n_elem % 128 != 0 -> host-side tail + partial row block.
    x1 = jax.random.normal(k1, (8, 200), dtype=jnp.float32) * 2.0
    t1 = jax.random.bernoulli(k2, p=0.3, shape=(8, 200)).astype(jnp.float32)
    out1 = jax.block_until_ready(bce_focal_loss(x1, t1))
    ref1 = jax.block_until_ready(_reference(x1, t1))
    assert np.allclose(np.asarray(out1), np.asarray(ref1), rtol=1e-4, atol=1e-6), \
        (float(out1), float(ref1))

    # Case 2: element count is a multiple of 128 -> zero-copy fast path.
    x2 = jax.random.normal(k3, (32, 256), dtype=jnp.float32) * 2.0
    t2 = jax.random.bernoulli(k4, p=0.3, shape=(32, 256)).astype(jnp.float32)
    out2 = jax.block_until_ready(bce_focal_loss(x2, t2))
    ref2 = jax.block_until_ready(_reference(x2, t2))
    assert np.allclose(np.asarray(out2), np.asarray(ref2), rtol=1e-4, atol=1e-6), \
        (float(out2), float(ref2))

    # Case 3: multi-block accumulation (+ 2-way TC split on v7x) with a partial
    # last block; small data, small forced block size.
    x3 = jax.random.normal(k5, (64, 500), dtype=jnp.float32) * 2.0
    t3 = jax.random.bernoulli(k6, p=0.3, shape=(64, 500)).astype(jnp.float32)
    out3 = jax.block_until_ready(bce_focal_loss(x3, t3, max_block_rows=64))
    ref3 = jax.block_until_ready(_reference(x3, t3))
    assert np.allclose(np.asarray(out3), np.asarray(ref3), rtol=1e-4, atol=1e-6), \
        (float(out3), float(ref3))

    # Case 4: tiny input (< one 128-lane row) -> pure host path.
    x4 = x1[:1, :15]
    t4 = t1[:1, :15]
    out4 = jax.block_until_ready(bce_focal_loss(x4, t4))
    ref4 = jax.block_until_ready(_reference(x4, t4))
    assert np.allclose(np.asarray(out4), np.asarray(ref4), rtol=1e-4, atol=1e-6), \
        (float(out4), float(ref4))

    print("KERNEL_OK")
</pallas_src>

<mosaic_0001>
module attributes {stable_mosaic.version = 11 : i64} {
  func.func @_bce_focal_sum_kernel(%arg0: i32, %arg1: i32, %arg2: memref<16x128xf32, #tpu.memory_space<vmem>>, %arg3: memref<16x128xf32, #tpu.memory_space<vmem>>, %arg4: memref<1x8x128xf32, #tpu.memory_space<vmem>>, %arg5: memref<8x128xf32, #tpu.memory_space<vmem>>) attributes {dimension_semantics = [#tpu.dimension_semantics<parallel>, #tpu.dimension_semantics<arbitrary>], iteration_bounds = array<i64: 1, 1>, scalar_prefetch = 0 : i64, scratch_operands = 1 : i64, tpu.core_type = #tpu.core_type<tc>, window_params = [{transform_indices = @transform_0, window_bounds = array<i64: 16, 128>}, {transform_indices = @transform_1, window_bounds = array<i64: 16, 128>}, {transform_indices = @transform_2, window_bounds = array<i64: 1, 8, 128>}]} {
    %c0_i32 = arith.constant 0 : i32
    %0 = arith.cmpi eq, %arg1, %c0_i32 : i32
    %1 = arith.extui %0 : i1 to i32
    %c0_i32_0 = arith.constant 0 : i32
    %2 = arith.cmpi ne, %1, %c0_i32_0 : i32
    scf.if %2 {
      %cst_16 = arith.constant 0.000000e+00 : f32
      %52 = vector.broadcast %cst_16 : f32 to vector<8x128xf32>
      %c0_17 = arith.constant 0 : index
      %c0_18 = arith.constant 0 : index
      %53 = vector.load %arg5[%c0_17, %c0_18] : memref<8x128xf32, #tpu.memory_space<vmem>>, vector<8x128xf32>
      tpu.vector_store %arg5[%c0_17, %c0_18], %52 {strides = array<i32>} : memref<8x128xf32, #tpu.memory_space<vmem>>, vector<8x128xf32>,
    } else {
    }
    %c0 = arith.constant 0 : index
    %c0_1 = arith.constant 0 : index
    %3 = vector.load %arg2[%c0, %c0_1] : memref<16x128xf32, #tpu.memory_space<vmem>>, vector<16x128xf32>
    %c0_2 = arith.constant 0 : index
    %c0_3 = arith.constant 0 : index
    %4 = vector.load %arg3[%c0_2, %c0_3] : memref<16x128xf32, #tpu.memory_space<vmem>>, vector<16x128xf32>
    %5 = math.absf %3 : vector<16x128xf32>
    %cst = arith.constant 0.000000e+00 : f32
    %6 = vector.broadcast %cst : f32 to vector<16x128xf32>
    %7 = arith.subf %6, %5 : vector<16x128xf32>
    %8 = math.exp %7 : vector<16x128xf32>
    %cst_4 = arith.constant 1.000000e+00 : f32
    %9 = vector.broadcast %cst_4 : f32 to vector<16x128xf32>
    %10 = arith.addf %9, %8 : vector<16x128xf32>
    %11 = tpu.reciprocal %10 {approx = true} : vector<16x128xf32> -> vector<16x128xf32>
    %12 = arith.mulf %10, %11 : vector<16x128xf32>
    %cst_5 = arith.constant 2.000000e+00 : f32
    %13 = vector.broadcast %cst_5 : f32 to vector<16x128xf32>
    %14 = arith.subf %13, %12 : vector<16x128xf32>
    %15 = arith.mulf %11, %14 : vector<16x128xf32>
    %16 = arith.mulf %8, %15 : vector<16x128xf32>
    %cst_6 = arith.constant 0.000000e+00 : f32
    %17 = vector.broadcast %cst_6 : f32 to vector<16x128xf32>
    %18 = arith.cmpf oge, %3, %17 : vector<16x128xf32>
    %19 = arith.select %18, %15, %16 : vector<16x128xi1>, vector<16x128xf32>
    %20 = arith.select %18, %16, %15 : vector<16x128xi1>, vector<16x128xf32>
    %21 = math.log %10 : vector<16x128xf32>
    %cst_7 = arith.constant 0.000000e+00 : f32
    %22 = vector.broadcast %cst_7 : f32 to vector<16x128xf32>
    %23 = arith.minimumf %3, %22 : vector<16x128xf32>
    %24 = arith.subf %23, %21 : vector<16x128xf32>
    %25 = arith.subf %24, %3 : vector<16x128xf32>
    %26 = arith.mulf %20, %20 : vector<16x128xf32>
    %27 = arith.mulf %19, %19 : vector<16x128xf32>
    %cst_8 = arith.constant -2.500000e-01 : f32
    %28 = vector.broadcast %cst_8 : f32 to vector<16x128xf32>
    %29 = arith.mulf %28, %26 : vector<16x128xf32>
    %30 = arith.mulf %29, %4 : vector<16x128xf32>
    %31 = arith.mulf %30, %24 : vector<16x128xf32>
    %cst_9 = arith.constant 7.500000e-01 : f32
    %32 = vector.broadcast %cst_9 : f32 to vector<16x128xf32>
    %33 = arith.mulf %32, %27 : vector<16x128xf32>
    %cst_10 = arith.constant 1.000000e+00 : f32
    %34 = vector.broadcast %cst_10 : f32 to vector<16x128xf32>
    %35 = arith.subf %34, %4 : vector<16x128xf32>
    %36 = arith.mulf %33, %35 : vector<16x128xf32>
    %37 = arith.mulf %36, %25 : vector<16x128xf32>
    %38 = arith.subf %31, %37 : vector<16x128xf32>
    %c1_i32 = arith.constant 1 : i32
    %39 = arith.muli %arg0, %c1_i32 : i32
    %40 = arith.addi %39, %arg1 : i32
    %c1_i32_11 = arith.constant 1 : i32
    %41 = arith.addi %40, %c1_i32_11 : i32
    %c16_i32 = arith.constant 16 : i32
    %42 = arith.muli %41, %c16_i32 : i32
    %c12_i32 = arith.constant 12 : i32
    %43 = arith.cmpi sle, %42, %c12_i32 : i32
    %44 = arith.extui %43 : i1 to i32
    %c0_i32_12 = arith.constant 0 : i32
    %45 = arith.cmpi ne, %44, %c0_i32_12 : i32
    scf.if %45 {
      %c0_16 = arith.constant 0 : index
      %c0_17 = arith.constant 0 : index
      %52 = vector.load %arg5[%c0_16, %c0_17] : memref<8x128xf32, #tpu.memory_space<vmem>>, vector<8x128xf32>
      %53 = vector.shape_cast %38 : vector<16x128xf32> to vector<2x8x128xf32>
      %cst_18 = arith.constant dense<0.000000e+00> : vector<8x128xf32>
      %54 = vector.multi_reduction <add>, %53, %cst_18 [0] : vector<2x8x128xf32> to vector<8x128xf32>
      %55 = arith.addf %52, %54 : vector<8x128xf32>
      %c0_19 = arith.constant 0 : index
      %c0_20 = arith.constant 0 : index
      %56 = vector.load %arg5[%c0_19, %c0_20] : memref<8x128xf32, #tpu.memory_space<vmem>>, vector<8x128xf32>
      tpu.vector_store %arg5[%c0_19, %c0_20], %55 {strides = array<i32>} : memref<8x128xf32, #tpu.memory_space<vmem>>, vector<8x128xf32>,
    } else {
    }
    %true = arith.constant true
    %46 = arith.xori %43, %true : i1
    %47 = arith.extui %46 : i1 to i32
    %c0_i32_13 = arith.constant 0 : i32
    %48 = arith.cmpi ne, %47, %c0_i32_13 : i32
    scf.if %48 {
      %c16_i32_16 = arith.constant 16 : i32
      %52 = arith.muli %40, %c16_i32_16 : i32
      %53 = tpu.iota {dimensions = array<i32: 0>} : vector<16x128xi32>
      %54 = vector.broadcast %52 : i32 to vector<16x128xi32>
      %55 = arith.addi %54, %53 : vector<16x128xi32>
      %c12_i32_17 = arith.constant 12 : i32
      %56 = vector.broadcast %c12_i32_17 : i32 to vector<16x128xi32>
      %57 = arith.cmpi slt, %55, %56 : vector<16x128xi32>
      %cst_18 = arith.constant 0.000000e+00 : f32
      %58 = vector.broadcast %cst_18 : f32 to vector<16x128xf32>
      %59 = arith.select %57, %38, %58 : vector<16x128xi1>, vector<16x128xf32>
      %c0_19 = arith.constant 0 : index
      %c0_20 = arith.constant 0 : index
      %60 = vector.load %arg5[%c0_19, %c0_20] : memref<8x128xf32, #tpu.memory_space<vmem>>, vector<8x128xf32>
      %61 = vector.shape_cast %59 : vector<16x128xf32> to vector<2x8x128xf32>
      %cst_21 = arith.constant dense<0.000000e+00> : vector<8x128xf32>
      %62 = vector.multi_reduction <add>, %61, %cst_21 [0] : vector<2x8x128xf32> to vector<8x128xf32>
      %63 = arith.addf %60, %62 : vector<8x128xf32>
      %c0_22 = arith.constant 0 : index
      %c0_23 = arith.constant 0 : index
      %64 = vector.load %arg5[%c0_22, %c0_23] : memref<8x128xf32, #tpu.memory_space<vmem>>, vector<8x128xf32>
      tpu.vector_store %arg5[%c0_22, %c0_23], %63 {strides = array<i32>} : memref<8x128xf32, #tpu.memory_space<vmem>>, vector<8x128xf32>,
    } else {
    }
    %c0_i32_14 = arith.constant 0 : i32
    %49 = arith.cmpi eq, %arg1, %c0_i32_14 : i32
    %50 = arith.extui %49 : i1 to i32
    %c0_i32_15 = arith.constant 0 : i32
    %51 = arith.cmpi ne, %50, %c0_i32_15 : i32
    scf.if %51 {
      %c0_16 = arith.constant 0 : index
      %c0_17 = arith.constant 0 : index
      %52 = vector.load %arg5[%c0_16, %c0_17] : memref<8x128xf32, #tpu.memory_space<vmem>>, vector<8x128xf32>
      %53 = vector.shape_cast %52 : vector<8x128xf32> to vector<1x8x128xf32>
      %c0_18 = arith.constant 0 : index
      %c0_19 = arith.constant 0 : index
      %c0_20 = arith.constant 0 : index
      %54 = vector.load %arg4[%c0_18, %c0_19, %c0_20] : memref<1x8x128xf32, #tpu.memory_space<vmem>>, vector<1x8x128xf32>
      tpu.vector_store %arg4[%c0_18, %c0_19, %c0_20], %53 {strides = array<i32>} : memref<1x8x128xf32, #tpu.memory_space<vmem>>, vector<1x8x128xf32>,
    } else {
    }
    return
  }
  func.func @transform_0(%arg0: i32, %arg1: i32) -> (i32, i32) {
    %c1_i32 = arith.constant 1 : i32
    %0 = arith.muli %arg0, %c1_i32 : i32
    %1 = arith.addi %0, %arg1 : i32
    %c0_i32 = arith.constant 0 : i32
    %2 = arith.minsi %1, %c0_i32 : i32
    %c0_i32_0 = arith.constant 0 : i32
    %c0_i32_1 = arith.constant 0 : i32
    return %2, %c0_i32_0 : i32, i32
  }
  func.func @transform_1(%arg0: i32, %arg1: i32) -> (i32, i32) {
    %c1_i32 = arith.constant 1 : i32
    %0 = arith.muli %arg0, %c1_i32 : i32
    %1 = arith.addi %0, %arg1 : i32
    %c0_i32 = arith.constant 0 : i32
    %2 = arith.minsi %1, %c0_i32 : i32
    %c0_i32_0 = arith.constant 0 : i32
    %c0_i32_1 = arith.constant 0 : i32
    return %2, %c0_i32_0 : i32, i32
  }
  func.func @transform_2(%arg0: i32, %arg1: i32) -> (i32, i32, i32) {
    %c0_i32 = arith.constant 0 : i32
    %c0_i32_0 = arith.constant 0 : i32
    %c0_i32_1 = arith.constant 0 : i32
    return %arg0, %c0_i32, %c0_i32_0 : i32, i32, i32
  }
}

</mosaic_0001>

<llo_original>
// kernel: tpu_custom_call.1
$region0: #{tpu_custom_call.1}
  #allocation0 [shape = 'u32[]', space=smem, size = 0x4, offset = 0x4, fixed_abs, tag = 'smem constant byte address 0x4 - core index']
  #allocation1 [shape = 'u32[144,128]{1,0:T(1,128)}', space=vmem, size = 0x12000, scoped, tag = 'internal scratch']
  #allocation2 [shape = 'f32[8,128]{1,0:T(8,128)}', space=vmem, size = 0x1000, scoped, tag = 'scratch operand']
  %s0 = inlined_call_operand.hbm [shape: f32[12,128], index: 0, kind: input, shape index: {}]
  %s1 = inlined_call_operand.hbm [shape: f32[12,128], index: 1, kind: input, shape index: {}]
  %s2 = inlined_call_operand.hbm [shape: f32[1,8,128], index: 2, kind: output, shape index: {}]
  %s3 = sld [smem:[#allocation0]]
  $region42: #{tpu_custom_call.1} parent=0
    _
  %s5 = ssub.s32 1, %s3
  %s6 = scalar_select 0, %s5, %s3
  $region1: #{tpu_custom_call.1} parent=0
    #allocation3 [shape = 'u8[8192]{0}', space=vmem, size = 0x2000, scoped, tag = 'input window, operand 0, single buffered']
    #allocation4 [shape = 's32[1]{0}', space=sflag, size = 0x4, scoped, tag = 'scoped memory for tpu_custom_call.1']
    #allocation5 [shape = 's32[1]{0}', space=sflag, size = 0x4, scoped, tag = 'scoped memory for tpu_custom_call.1']
    #allocation6 [shape = 'u8[8192]{0}', space=vmem, size = 0x2000, scoped, tag = 'input window, operand 1, single buffered']
    #allocation7 [shape = 's32[1]{0}', space=sflag, size = 0x4, scoped, tag = 'scoped memory for tpu_custom_call.1']
    #allocation8 [shape = 'u8[4096]{0}', space=vmem, size = 0x1000, scoped, tag = 'output window, operand 0, single buffered']
    %7 = vsyncpa [#allocation4], 0
    %8 = vsyncpa [#allocation7], 0
    %9 = vsyncpa [#allocation5], 0
    // Predicated region
    $region2: #{tpu_custom_call.1} parent=1 // pred_check
      _
    $region3: #{tpu_custom_call.1} parent=1 // pred_check_branch
      %11 = sbr.rel (0) target = $region5
    $region4: #{tpu_custom_call.1} parent=1 // pred_region
      %s12 = sadd.s32 0, 0
      %p13 = scmp.lt.s32.totalorder %s12, 0
      %s14 = scalar_select %p13, %s12, 0
      %s15 = smul.u32 2, %s14
      %s17 = ssub.s32 256, 256
      %18 = vsyncadd [#allocation4], %s17
      %s19 = smul.addr %s15, 128
      %s20 = scalar_lea.hbm %s0, %s19
      %s21 = sshll.u32 [#allocation3], 4
      %s22 = int_to_ptr.vmem [resolvable:$true] %s21
      %27 = dma.hbm_to_vmem [thread:$0]  %s20, 256, %s22, [#allocation4], 128, 128, 8
    $region5: #{tpu_custom_call.1} parent=1 // pred_fallthru
      _
    // Predicated region
    $region6: #{tpu_custom_call.1} parent=1 // pred_check
      _
    $region7: #{tpu_custom_call.1} parent=1 // pred_check_branch
      %29 = sbr.rel (0) target = $region9
    $region8: #{tpu_custom_call.1} parent=1 // pred_region
      %s30 = sadd.s32 0, 0
      %p31 = scmp.lt.s32.totalorder %s30, 0
      %s32 = scalar_select %p31, %s30, 0
      %s33 = smul.u32 2, %s32
      %s35 = ssub.s32 256, 256
      %36 = vsyncadd [#allocation7], %s35
      %s37 = smul.addr %s33, 128
      %s38 = scalar_lea.hbm %s1, %s37
      %s39 = sshll.u32 [#allocation6], 4
      %s40 = int_to_ptr.vmem [resolvable:$true] %s39
      %45 = dma.hbm_to_vmem [thread:$0]  %s38, 256, %s40, [#allocation7], 128, 128, 8
    $region9: #{tpu_custom_call.1} parent=1 // pred_fallthru
      _
    // Predicated region
    $region10: #{tpu_custom_call.1} parent=1 // pred_check
      _
    $region11: #{tpu_custom_call.1} parent=1 // pred_check_branch
      %47 = sbr.rel (0) target = $region13
    $region12: #{tpu_custom_call.1} parent=1 // pred_region
      %48 = dma.done [#allocation4], 256
    $region13: #{tpu_custom_call.1} parent=1 // pred_fallthru
      _
    // Predicated region
    $region14: #{tpu_custom_call.1} parent=1 // pred_check
      _
    $region15: #{tpu_custom_call.1} parent=1 // pred_check_branch
      %50 = sbr.rel (0) target = $region17
    $region16: #{tpu_custom_call.1} parent=1 // pred_region
      %51 = dma.done [#allocation7], 256
    $region17: #{tpu_custom_call.1} parent=1 // pred_fallthru
      _
    %s52 = sadd.s32 0, 0
    %p53 = scmp.lt.s32.totalorder %s52, 0
    %s54 = scalar_select %p53, %s52, 0
    %s55 = smul.u32 2, %s54
    %s56 = sadd.s32 0, 0
    %p57 = scmp.lt.s32.totalorder %s56, 0
    %s58 = scalar_select %p57, %s56, 0
    %s59 = smul.u32 2, %s58
    %p60 = scmp.eq.s32.totalorder 0, 0
    // Predicated region
    $region18: #{tpu_custom_call.1} parent=1 // pred_check
      %p61 = pneg %p60
    $region19: #{tpu_custom_call.1} parent=1 // pred_check_branch
      %63 = sbr.rel (%p61) target = $region21
    $region20: #{tpu_custom_call.1} parent=1 // pred_region
      %64 = vst [vmem:[#allocation2] sm:$0xff] 0.0
    $region21: #{tpu_custom_call.1} parent=1 // pred_fallthru
      _
    %v65 = vld [vmem:[#allocation3] sm:$0xff]
    %v66 = vld [vmem:[#allocation3 + $0x8] sm:$0xff]
    %v67 = vld [vmem:[#allocation6] sm:$0xff]
    %v68 = vld [vmem:[#allocation6 + $0x8] sm:$0xff]
    %v69 = vand.u32 2147483647, %v65
    %v70 = vand.u32 2147483647, %v66
    %v71 = vsub.f32 0.0, %v69
    %v72 = vsub.f32 0.0, %v70
    %v73 = vmul.f32 %v71, 1.442695
    %v74 = vpow.pop %v73
    %v75 = vmul.f32 %v72, 1.442695
    %v76 = vpow.pop %v75
    %v77 = vadd.f32 %v74, 1.0
    %v78 = vadd.f32 %v76, 1.0
    %v79 = vrcp.pop %v77
    %v80 = vrcp.pop %v78
    %v81 = vmul.f32 %v77, %v79
    %v82 = vmul.f32 %v78, %v80
    %v83 = vsub.f32 2.0, %v81
    %v84 = vsub.f32 2.0, %v82
    %v85 = vmul.f32 %v79, %v83
    %v86 = vmul.f32 %v80, %v84
    %v87 = vmul.f32 %v74, %v85
    %v88 = vmul.f32 %v76, %v86
    %vm89 = vcmp.ge.f32.partialorder %v65, 0.0
    %vm90 = vcmp.ge.f32.partialorder %v66, 0.0
    %v91 = vsel %vm89, %v85, %v87
    %v92 = vsel %vm90, %v86, %v88
    %v93 = vsel %vm89, %v87, %v85
    %v94 = vsel %vm90, %v88, %v86
    %v95 = vlog2.pop %v77
    %v96 = vmul.f32 %v95, 0.6931472
    %v97 = vlog2.pop %v78
    %v98 = vmul.f32 %v97, 0.6931472
    %v99 = vmin.f32 %v65, 0.0
    %v100 = vmin.f32 %v66, 0.0
    %v101 = vsub.f32 %v99, %v96
    %v102 = vsub.f32 %v100, %v98
    %v103 = vsub.f32 %v101, %v65
    %v104 = vsub.f32 %v102, %v66
    %v105 = vmul.f32 %v93, %v93
    %v106 = vmul.f32 %v94, %v94
    %v107 = vmul.f32 %v91, %v91
    %v108 = vmul.f32 %v92, %v92
    %v109 = vmul.f32 %v105, -0.25
    %v110 = vmul.f32 %v106, -0.25
    %v111 = vmul.f32 %v109, %v67
    %v112 = vmul.f32 %v110, %v68
    %v113 = vmul.f32 %v111, %v101
    %v114 = vmul.f32 %v112, %v102
    %v115 = vmul.f32 %v107, 0.75
    %v116 = vmul.f32 %v108, 0.75
    %v117 = vsub.f32 1.0, %v67
    %v118 = vsub.f32 1.0, %v68
    %v119 = vmul.f32 %v115, %v117
    %v120 = vmul.f32 %v116, %v118
    %v121 = vmul.f32 %v119, %v103
    %v122 = vmul.f32 %v120, %v104
    %v123 = vsub.f32 %v113, %v121
    %v124 = vsub.f32 %v114, %v122
    %s125 = sadd.s32 0, 0
    %s126 = sadd.s32 %s125, 1
    %s127 = smul.u32 %s126, 16
    %p128 = scmp.le.s32.totalorder %s127, 12
    // Predicated region
    $region22: #{tpu_custom_call.1} parent=1 // pred_check
      %p129 = pneg %p128
    $region23: #{tpu_custom_call.1} parent=1 // pred_check_branch
      %131 = sbr.rel (%p129) target = $region25
    $region24: #{tpu_custom_call.1} parent=1 // pred_region
      %v132 = vld [vmem:[#allocation2] sm:$0xff]
      %v133 = vadd.f32 %v123, %v124
      %v134 = vadd.f32 %v132, %v133
      %135 = vst [vmem:[#allocation2] sm:$0xff] %v134
    $region25: #{tpu_custom_call.1} parent=1 // pred_fallthru
      _
    %p136 = scmp.gt.s32.totalorder %s127, 12
    // Predicated region
    $region26: #{tpu_custom_call.1} parent=1 // pred_check
      %p137 = pneg %p136
    $region27: #{tpu_custom_call.1} parent=1 // pred_check_branch
      %139 = sbr.rel (%p137) target = $region29
    $region28: #{tpu_custom_call.1} parent=1 // pred_region
      %s140 = smul.u32 %s125, 16
      %v141 = vlaneseq
      %v142 = vshrl.u32 %v141, 7
      %v143 = vadd.s32 %v142, 8
      %v144 = vstv %s140
      %v145 = vadd.s32 %v144, %v142
      %v146 = vadd.s32 %v144, %v143
      %vm147 = vcmp.lt.s32.totalorder %v145, 12
      %vm148 = vcmp.lt.s32.totalorder %v146, 12
      %v149 = vsel %vm147, %v123, 0.0
      %v150 = vsel %vm148, %v124, 0.0
      %v151 = vld [vmem:[#allocation2] sm:$0xff]
      %v152 = vadd.f32 %v149, %v150
      %v153 = vadd.f32 %v151, %v152
      %154 = vst [vmem:[#allocation2] sm:$0xff] %v153
    $region29: #{tpu_custom_call.1} parent=1 // pred_fallthru
      _
    // Predicated region
    $region30: #{tpu_custom_call.1} parent=1 // pred_check
      %p155 = pneg %p60
    $region31: #{tpu_custom_call.1} parent=1 // pred_check_branch
      %157 = sbr.rel (%p155) target = $region33
    $region32: #{tpu_custom_call.1} parent=1 // pred_region
      %v158 = vld [vmem:[#allocation2] sm:$0xff]
      %159 = vst [vmem:[#allocation8] sm:$0xff] %v158
    $region33: #{tpu_custom_call.1} parent=1 // pred_fallthru
      _
    // Predicated region
    $region34: #{tpu_custom_call.1} parent=1 // pred_check
      _
    $region35: #{tpu_custom_call.1} parent=1 // pred_check_branch
      %161 = sbr.rel (0) target = $region37
    $region36: #{tpu_custom_call.1} parent=1 // pred_region
      %s163 = ssub.s32 128, 128
      %164 = vsyncadd [#allocation5], %s163
      %s166 = sshll.u32 [#allocation8], 4
      %s167 = int_to_ptr.vmem [resolvable:$true] %s166
      %169 = dma.vmem_to_hbm [thread:$0]  %s167, 128, %s2, [#allocation5]
    $region37: #{tpu_custom_call.1} parent=1 // pred_fallthru
      _
    // Predicated region
    $region38: #{tpu_custom_call.1} parent=1 // pred_check
      _
    $region39: #{tpu_custom_call.1} parent=1 // pred_check_branch
      %171 = sbr.rel (0) target = $region41
    $region40: #{tpu_custom_call.1} parent=1 // pred_region
      %172 = dma.done [#allocation5], 128
    $region41: #{tpu_custom_call.1} parent=1 // pred_fallthru
      _
    %173 = vsyncpa [#allocation4], 1
    %174 = vsyncpa [#allocation7], 1
    %175 = vsyncpa [#allocation5], 1

</llo_original>
